<compile_context>
chip_gen: v7x
topology: tpu7x:2x2x1
jax: 0.10.0
libtpu: 0.0.40
codegen_flags: <defaults>
</compile_context>

<pallas_src>
import functools

import jax
import jax.numpy as jnp
from jax.experimental import pallas as pl
from jax.experimental.pallas import tpu as pltpu


_FW = 768  # fold / accumulator width: multiple of 3 (channel period) and 128 (lane tile)


# ----------------------------------------------------------------------------
# Kernel
# ----------------------------------------------------------------------------
def _reflectance_loss_kernel(tex_ref, mask_ref, chan_ref, out_ref,
                             a1_ref, a3_ref, am_ref, a2_ref, am2_ref,
                             shift_ref, *, batch, folds, binary_mask):
    """One grid step = one (B, folds*_FW) lane tile of the interleaved texture.

    Folds the tile into tiny persistent (B, 768) VMEM accumulators with pure
    VPU work; the last step does the per-channel XLU reductions and writes
    the scalar loss.
    """
    i = pl.program_id(0)
    f32 = jnp.float32

    @pl.when(i == 0)
    def _init():
        a1_ref[...] = jnp.zeros_like(a1_ref)
        a3_ref[...] = jnp.zeros_like(a3_ref)
        am_ref[...] = jnp.zeros_like(am_ref)
        if not binary_mask:
            a2_ref[...] = jnp.zeros_like(a2_ref)
            am2_ref[...] = jnp.zeros_like(am2_ref)
        # Precision shift: masked per-batch mean of the first chunk.  Any
        # finite value is correct (the loss is shift invariant); this keeps
        # the non-centered variance formula well conditioned.
        m0 = mask_ref[:, 0:_FW].astype(f32)                        # (1, FW)
        x0 = jnp.where(m0 != 0.0, tex_ref[:, 0:_FW].astype(f32), 0.0)
        num = jnp.sum(x0 * m0, axis=-1, keepdims=True)             # (B, 1)
        den = jnp.sum(m0, axis=-1, keepdims=True)                  # (1, 1)
        shift_ref[...] = jnp.where(den > 0.0, num / den, 0.0)

    shift = shift_ref[...]                                         # (B, 1)

    a1 = a1_ref[...]                                               # (B, FW)
    a3 = a3_ref[...]
    am = am_ref[...]                                               # (1, FW)
    if not binary_mask:
        a2 = a2_ref[...]
        am2 = am2_ref[...]

    # Fold the tile into the 768-lane accumulators with element-wise VPU work
    # only; no per-tile cross-lane reduces, no wide scratch stores.
    for f in range(folds):                                         # static unroll (small)
        sl = slice(f * _FW, (f + 1) * _FW)
        m = mask_ref[:, sl].astype(f32)                            # (1, FW)
        x = tex_ref[:, sl].astype(f32)                             # (B, FW)
        # mask==0 lanes (masked-out vertices, ragged tail, OOB garbage of a
        # partial last block) are select-zeroed, then centered.
        y = jnp.where(m != 0.0, x, 0.0) - shift
        my = m * y
        a1 = a1 + my                                               # sum m*y
        a3 = a3 + my * my                                          # sum m^2*y^2
        am = am + m                                                # sum m
        if not binary_mask:
            a2 = a2 + m * my                                       # sum m^2*y
            am2 = am2 + m * m                                      # sum m^2

    a1_ref[...] = a1
    a3_ref[...] = a3
    am_ref[...] = am
    if not binary_mask:
        a2_ref[...] = a2
        am2_ref[...] = am2

    @pl.when(i == pl.num_programs(0) - 1)
    def _finalize():
        chan = chan_ref[...]                                       # (1, FW) of 0/1/2
        total = jnp.zeros((1, 1), f32)
        sm = None
        sm2 = None
        for c in range(3):
            sel = (chan == float(c)).astype(f32)                   # (1, FW)
            s1 = jnp.sum(a1 * sel, axis=-1, keepdims=True)         # (B, 1)
            s3 = jnp.sum(a3 * sel, axis=-1, keepdims=True)         # (B, 1)
            if c == 0:
                # each vertex's mask value lands in exactly one channel-0 lane
                sm = jnp.sum(am * sel, axis=-1, keepdims=True)     # (1, 1) = sum(mask)
                if not binary_mask:
                    sm2 = jnp.sum(am2 * sel, axis=-1, keepdims=True)
            if binary_mask:
                # 0/1 mask: m^2 == m, so S2 == S1 and SM2 == SM.
                term = s3 - (s1 * s1) / sm
            else:
                s2 = jnp.sum(a2 * sel, axis=-1, keepdims=True)
                mean = s1 / sm
                term = s3 - 2.0 * mean * s2 + (mean * mean) * sm2
            total = total + jnp.sum(term, axis=0, keepdims=True)   # sum over batch
        out_ref[...] = total / (float(batch) * sm)


# ----------------------------------------------------------------------------
# Wrapper
# ----------------------------------------------------------------------------
def reflectance_loss(texture, mask, *, binary_mask=True,
                     target_block_bytes=2 * 1024 * 1024, max_folds=64):
    """texture: (B, N, 3), mask: (N,).  Returns the scalar f32 loss.

    `texture` is consumed in its own dtype (pass bf16 only if it already lives
    in HBM as bf16 -- no wrapper-side casts are added).  `binary_mask=True`
    (the module's documented contract: mask values are 0 or 1) uses the
    cheaper 3-statistic reduction; set it False for arbitrary mask values.
    """
    B, N, C = texture.shape
    assert C == 3, texture.shape
    assert mask.shape == (N,), mask.shape
    L = 3 * N

    # Free, copy-less reshape: channels stay interleaved along the lanes
    # (lane j  <->  vertex j // 3, channel j % 3).  No transpose.
    tex2 = texture.reshape(B, L)

    # Lane-tile sizing: ~target_block_bytes of texture per grid step, in whole
    # multiples of the 768-lane fold width (768 = 2 * lcm(3, 128)).
    itemsize = texture.dtype.itemsize
    folds = max(1, min(max_folds, target_block_bytes // (B * _FW * itemsize)))
    folds = min(folds, pl.cdiv(L, _FW))
    # TODO(synk): for tiny B with very large N, switch the static fold unroll
    # to an in-kernel lax.fori_loop so blocks can grow past max_folds.
    tile = folds * _FW
    n_tiles = pl.cdiv(L, tile)
    l_pad = n_tiles * tile

    # Tiny per-lane helpers (O(N) and O(1) floats -- negligible vs texture):
    #   mask3: mask replicated per channel, zero-padded to the grid extent
    #          (its zeros also neutralize any OOB lanes of a partial block).
    #   chan : channel id of each accumulator lane (0,1,2,0,1,2,...).
    mask3 = jnp.repeat(mask.astype(jnp.float32), 3).reshape(1, L)
    if l_pad != L:
        mask3 = jnp.pad(mask3, ((0, 0), (0, l_pad - L)))
    chan = jnp.tile(jnp.arange(3, dtype=jnp.float32), _FW // 3).reshape(1, _FW)

    if n_tiles == 1 and l_pad != L:
        # A single block must not over-run the array's lane extent; here the
        # whole texture is smaller than one block (< ~2 MiB), so padding it
        # is cheap.  Large textures are never padded.
        tex2 = jnp.pad(tex2, ((0, 0), (0, l_pad - L)))

    kernel = functools.partial(_reflectance_loss_kernel, batch=B, folds=folds,
                               binary_mask=binary_mask)

    # TODO(synk): on v7x, split the lane grid over the 2 TensorCores (leading
    # parallel axis writing per-core partial sums) for another ~2x on very
    # large N; a single core is already HBM-bound on v5e/v6e.
    out = pl.pallas_call(
        kernel,
        out_shape=jax.ShapeDtypeStruct((1, 1), jnp.float32),
        grid_spec=pltpu.PrefetchScalarGridSpec(
            num_scalar_prefetch=0,
            grid=(n_tiles,),
            in_specs=[
                pl.BlockSpec((B, tile), lambda i: (0, i)),   # texture lanes
                pl.BlockSpec((1, tile), lambda i: (0, i)),   # per-lane mask
                pl.BlockSpec((1, _FW), lambda i: (0, 0)),    # channel ids
            ],
            out_specs=pl.BlockSpec((1, 1), lambda i: (0, 0)),
            scratch_shapes=[
                pltpu.VMEM((B, _FW), jnp.float32),   # a1 : sum m*y
                pltpu.VMEM((B, _FW), jnp.float32),   # a3 : sum m^2*y^2
                pltpu.VMEM((1, _FW), jnp.float32),   # am : sum m
                pltpu.VMEM((B, _FW), jnp.float32),   # a2 : sum m^2*y   (general mask)
                pltpu.VMEM((1, _FW), jnp.float32),   # am2: sum m^2     (general mask)
                pltpu.VMEM((B, 1), jnp.float32),     # per-batch precision shift
            ]),
        compiler_params=pltpu.CompilerParams(
            dimension_semantics=("arbitrary",)),     # carried accumulators
    )(tex2, mask3, chan)
    return out[0, 0]


def reflectance_loss_ref(texture, mask):
    """Pure-JAX reference mirroring the PyTorch forward exactly."""
    B, N, _ = texture.shape
    m = mask.reshape(1, N, 1).astype(jnp.float32)
    tex = texture.astype(jnp.float32)
    tex_mean = jnp.sum(m * tex, axis=1, keepdims=True) / jnp.sum(m)
    return jnp.sum(((tex - tex_mean) * m) ** 2) / (B * jnp.sum(m))


if __name__ == "__main__":
    key = jax.random.PRNGKey(0)
    k1, k2, k3, k4 = jax.random.split(key, 4)

    # Small case: single grid step, lane count (600) not a multiple of 128.
    B, N = 2, 200
    texture = jax.random.uniform(k1, (B, N, 3), dtype=jnp.float32)
    mask = (jax.random.uniform(k2, (N,)) > 0.3).astype(jnp.float32)
    ref = reflectance_loss_ref(texture, mask)
    out = reflectance_loss(texture, mask)
    jax.block_until_ready(out)
    assert jnp.allclose(out, ref, rtol=1e-4, atol=1e-6), (out, ref)

    # Multi-step pipelined grid with a partial (in-kernel masked) last block.
    B2, N2 = 4, 1111
    texture2 = jax.random.uniform(k3, (B2, N2, 3), dtype=jnp.float32)
    mask2 = (jax.random.uniform(k4, (N2,)) > 0.5).astype(jnp.float32)
    ref2 = reflectance_loss_ref(texture2, mask2)
    out2 = reflectance_loss(texture2, mask2, target_block_bytes=1)  # force 1 fold/tile
    jax.block_until_ready(out2)
    assert jnp.allclose(out2, ref2, rtol=1e-4, atol=1e-6), (out2, ref2)

    # General (non-binary) mask path.
    mask_soft = jax.random.uniform(k2, (N,), dtype=jnp.float32)
    ref3 = reflectance_loss_ref(texture, mask_soft)
    out3 = reflectance_loss(texture, mask_soft, binary_mask=False)
    jax.block_until_ready(out3)
    assert jnp.allclose(out3, ref3, rtol=1e-4, atol=1e-6), (out3, ref3)

    print("KERNEL_OK")
</pallas_src>

<mosaic_0001>
module attributes {stable_mosaic.version = 11 : i64} {
  func.func @_reflectance_loss_kernel(%arg0: i32, %arg1: memref<2x768xf32, #tpu.memory_space<vmem>>, %arg2: memref<1x768xf32, #tpu.memory_space<vmem>>, %arg3: memref<1x768xf32, #tpu.memory_space<vmem>>, %arg4: memref<1x1xf32, #tpu.memory_space<vmem>>, %arg5: memref<2x768xf32, #tpu.memory_space<vmem>>, %arg6: memref<2x768xf32, #tpu.memory_space<vmem>>, %arg7: memref<1x768xf32, #tpu.memory_space<vmem>>, %arg8: memref<2x768xf32, #tpu.memory_space<vmem>>, %arg9: memref<1x768xf32, #tpu.memory_space<vmem>>, %arg10: memref<2x1xf32, #tpu.memory_space<vmem>>) attributes {dimension_semantics = [#tpu.dimension_semantics<arbitrary>], iteration_bounds = array<i64: 1>, scalar_prefetch = 0 : i64, scratch_operands = 6 : i64, tpu.core_type = #tpu.core_type<tc>, window_params = [{transform_indices = @transform_0, window_bounds = array<i64: 2, 768>}, {transform_indices = @transform_1, window_bounds = array<i64: 1, 768>}, {pipeline_mode = #tpu.pipeline_mode<synchronous>, transform_indices = @transform_2, window_bounds = array<i64: 1, 768>}, {pipeline_mode = #tpu.pipeline_mode<synchronous>, transform_indices = @transform_3, window_bounds = array<i64: 1, 1>}]} {
    %c0_i32 = arith.constant 0 : i32
    %0 = arith.cmpi eq, %arg0, %c0_i32 : i32
    %1 = arith.extui %0 : i1 to i32
    %c0_i32_0 = arith.constant 0 : i32
    %2 = arith.cmpi ne, %1, %c0_i32_0 : i32
    scf.if %2 {
      %cst_21 = arith.constant 0.000000e+00 : f32
      %29 = vector.broadcast %cst_21 : f32 to vector<2x768xf32>
      %c0_22 = arith.constant 0 : index
      %c0_23 = arith.constant 0 : index
      %30 = vector.load %arg5[%c0_22, %c0_23] : memref<2x768xf32, #tpu.memory_space<vmem>>, vector<2x768xf32>
      tpu.vector_store %arg5[%c0_22, %c0_23], %29 {strides = array<i32>} : memref<2x768xf32, #tpu.memory_space<vmem>>, vector<2x768xf32>,
      %cst_24 = arith.constant 0.000000e+00 : f32
      %31 = vector.broadcast %cst_24 : f32 to vector<2x768xf32>
      %c0_25 = arith.constant 0 : index
      %c0_26 = arith.constant 0 : index
      %32 = vector.load %arg6[%c0_25, %c0_26] : memref<2x768xf32, #tpu.memory_space<vmem>>, vector<2x768xf32>
      tpu.vector_store %arg6[%c0_25, %c0_26], %31 {strides = array<i32>} : memref<2x768xf32, #tpu.memory_space<vmem>>, vector<2x768xf32>,
      %cst_27 = arith.constant 0.000000e+00 : f32
      %33 = vector.broadcast %cst_27 : f32 to vector<1x768xf32>
      %c0_28 = arith.constant 0 : index
      %c0_29 = arith.constant 0 : index
      %34 = vector.load %arg7[%c0_28, %c0_29] : memref<1x768xf32, #tpu.memory_space<vmem>>, vector<1x768xf32>
      tpu.vector_store %arg7[%c0_28, %c0_29], %33 {strides = array<i32>} : memref<1x768xf32, #tpu.memory_space<vmem>>, vector<1x768xf32>,
      %c0_30 = arith.constant 0 : index
      %c0_31 = arith.constant 0 : index
      %35 = vector.load %arg2[%c0_30, %c0_31] : memref<1x768xf32, #tpu.memory_space<vmem>>, vector<1x768xf32>
      %cst_32 = arith.constant 0.000000e+00 : f32
      %36 = vector.broadcast %cst_32 : f32 to vector<1x768xf32>
      %37 = arith.cmpf one, %35, %36 : vector<1x768xf32>
      %c0_33 = arith.constant 0 : index
      %c0_34 = arith.constant 0 : index
      %38 = vector.load %arg1[%c0_33, %c0_34] : memref<2x768xf32, #tpu.memory_space<vmem>>, vector<2x768xf32>
      %cst_35 = arith.constant 0.000000e+00 : f32
      %39 = vector.shape_cast %37 : vector<1x768xi1> to vector<1x768xi1>
      %40 = vector.broadcast %39 : vector<1x768xi1> to vector<2x768xi1>
      %41 = vector.broadcast %cst_35 : f32 to vector<2x768xf32>
      %42 = arith.select %40, %38, %41 : vector<2x768xi1>, vector<2x768xf32>
      %43 = vector.broadcast %35 : vector<1x768xf32> to vector<2x768xf32>
      %44 = arith.mulf %42, %43 : vector<2x768xf32>
      %cst_36 = arith.constant dense<0.000000e+00> : vector<2xf32>
      %45 = vector.multi_reduction <add>, %44, %cst_36 [1] : vector<2x768xf32> to vector<2xf32>
      %46 = vector.shape_cast %45 : vector<2xf32> to vector<2x1xf32>
      %cst_37 = arith.constant dense<0.000000e+00> : vector<1xf32>
      %47 = vector.multi_reduction <add>, %35, %cst_37 [1] : vector<1x768xf32> to vector<1xf32>
      %48 = vector.shape_cast %47 : vector<1xf32> to vector<1x1xf32>
      %cst_38 = arith.constant 0.000000e+00 : f32
      %49 = vector.broadcast %cst_38 : f32 to vector<1x1xf32>
      %50 = arith.cmpf ogt, %48, %49 : vector<1x1xf32>
      %51 = vector.broadcast %48 : vector<1x1xf32> to vector<2x1xf32>
      %52 = arith.divf %46, %51 : vector<2x1xf32>
      %cst_39 = arith.constant 0.000000e+00 : f32
      %53 = vector.shape_cast %50 : vector<1x1xi1> to vector<1x1xi1>
      %54 = vector.broadcast %53 : vector<1x1xi1> to vector<2x1xi1>
      %55 = vector.broadcast %cst_39 : f32 to vector<2x1xf32>
      %56 = arith.select %54, %52, %55 : vector<2x1xi1>, vector<2x1xf32>
      %c0_40 = arith.constant 0 : index
      %c0_41 = arith.constant 0 : index
      %57 = vector.load %arg10[%c0_40, %c0_41] : memref<2x1xf32, #tpu.memory_space<vmem>>, vector<2x1xf32>
      tpu.vector_store %arg10[%c0_40, %c0_41], %56 {strides = array<i32>} : memref<2x1xf32, #tpu.memory_space<vmem>>, vector<2x1xf32>,
    } else {
    }
    %c0 = arith.constant 0 : index
    %c0_1 = arith.constant 0 : index
    %3 = vector.load %arg10[%c0, %c0_1] : memref<2x1xf32, #tpu.memory_space<vmem>>, vector<2x1xf32>
    %c0_2 = arith.constant 0 : index
    %c0_3 = arith.constant 0 : index
    %4 = vector.load %arg5[%c0_2, %c0_3] : memref<2x768xf32, #tpu.memory_space<vmem>>, vector<2x768xf32>
    %c0_4 = arith.constant 0 : index
    %c0_5 = arith.constant 0 : index
    %5 = vector.load %arg6[%c0_4, %c0_5] : memref<2x768xf32, #tpu.memory_space<vmem>>, vector<2x768xf32>
    %c0_6 = arith.constant 0 : index
    %c0_7 = arith.constant 0 : index
    %6 = vector.load %arg7[%c0_6, %c0_7] : memref<1x768xf32, #tpu.memory_space<vmem>>, vector<1x768xf32>
    %c0_8 = arith.constant 0 : index
    %c0_9 = arith.constant 0 : index
    %7 = vector.load %arg2[%c0_8, %c0_9] : memref<1x768xf32, #tpu.memory_space<vmem>>, vector<1x768xf32>
    %c0_10 = arith.constant 0 : index
    %c0_11 = arith.constant 0 : index
    %8 = vector.load %arg1[%c0_10, %c0_11] : memref<2x768xf32, #tpu.memory_space<vmem>>, vector<2x768xf32>
    %cst = arith.constant 0.000000e+00 : f32
    %9 = vector.broadcast %cst : f32 to vector<1x768xf32>
    %10 = arith.cmpf one, %7, %9 : vector<1x768xf32>
    %cst_12 = arith.constant 0.000000e+00 : f32
    %11 = vector.shape_cast %10 : vector<1x768xi1> to vector<1x768xi1>
    %12 = vector.broadcast %11 : vector<1x768xi1> to vector<2x768xi1>
    %13 = vector.broadcast %cst_12 : f32 to vector<2x768xf32>
    %14 = arith.select %12, %8, %13 : vector<2x768xi1>, vector<2x768xf32>
    %15 = vector.broadcast %3 : vector<2x1xf32> to vector<2x768xf32>
    %16 = arith.subf %14, %15 : vector<2x768xf32>
    %17 = vector.broadcast %7 : vector<1x768xf32> to vector<2x768xf32>
    %18 = arith.mulf %17, %16 : vector<2x768xf32>
    %19 = arith.addf %4, %18 : vector<2x768xf32>
    %20 = arith.mulf %18, %18 : vector<2x768xf32>
    %21 = arith.addf %5, %20 : vector<2x768xf32>
    %22 = arith.addf %6, %7 : vector<1x768xf32>
    %c0_13 = arith.constant 0 : index
    %c0_14 = arith.constant 0 : index
    %23 = vector.load %arg5[%c0_13, %c0_14] : memref<2x768xf32, #tpu.memory_space<vmem>>, vector<2x768xf32>
    tpu.vector_store %arg5[%c0_13, %c0_14], %19 {strides = array<i32>} : memref<2x768xf32, #tpu.memory_space<vmem>>, vector<2x768xf32>,
    %c0_15 = arith.constant 0 : index
    %c0_16 = arith.constant 0 : index
    %24 = vector.load %arg6[%c0_15, %c0_16] : memref<2x768xf32, #tpu.memory_space<vmem>>, vector<2x768xf32>
    tpu.vector_store %arg6[%c0_15, %c0_16], %21 {strides = array<i32>} : memref<2x768xf32, #tpu.memory_space<vmem>>, vector<2x768xf32>,
    %c0_17 = arith.constant 0 : index
    %c0_18 = arith.constant 0 : index
    %25 = vector.load %arg7[%c0_17, %c0_18] : memref<1x768xf32, #tpu.memory_space<vmem>>, vector<1x768xf32>
    tpu.vector_store %arg7[%c0_17, %c0_18], %22 {strides = array<i32>} : memref<1x768xf32, #tpu.memory_space<vmem>>, vector<1x768xf32>,
    %c0_i32_19 = arith.constant 0 : i32
    %26 = arith.cmpi eq, %arg0, %c0_i32_19 : i32
    %27 = arith.extui %26 : i1 to i32
    %c0_i32_20 = arith.constant 0 : i32
    %28 = arith.cmpi ne, %27, %c0_i32_20 : i32
    scf.if %28 {
      %c0_21 = arith.constant 0 : index
      %c0_22 = arith.constant 0 : index
      %29 = vector.load %arg3[%c0_21, %c0_22] : memref<1x768xf32, #tpu.memory_space<vmem>>, vector<1x768xf32>
      %cst_23 = arith.constant 0.000000e+00 : f32
      %30 = vector.broadcast %cst_23 : f32 to vector<1x1xf32>
      %cst_24 = arith.constant 0.000000e+00 : f32
      %31 = vector.broadcast %cst_24 : f32 to vector<1x768xf32>
      %32 = arith.cmpf oeq, %29, %31 : vector<1x768xf32>
      %33 = arith.extui %32 : vector<1x768xi1> to vector<1x768xi32>
      %34 = arith.sitofp %33 : vector<1x768xi32> to vector<1x768xf32>
      %35 = vector.broadcast %34 : vector<1x768xf32> to vector<2x768xf32>
      %36 = arith.mulf %19, %35 : vector<2x768xf32>
      %cst_25 = arith.constant dense<0.000000e+00> : vector<2xf32>
      %37 = vector.multi_reduction <add>, %36, %cst_25 [1] : vector<2x768xf32> to vector<2xf32>
      %38 = vector.shape_cast %37 : vector<2xf32> to vector<2x1xf32>
      %39 = vector.broadcast %34 : vector<1x768xf32> to vector<2x768xf32>
      %40 = arith.mulf %21, %39 : vector<2x768xf32>
      %cst_26 = arith.constant dense<0.000000e+00> : vector<2xf32>
      %41 = vector.multi_reduction <add>, %40, %cst_26 [1] : vector<2x768xf32> to vector<2xf32>
      %42 = vector.shape_cast %41 : vector<2xf32> to vector<2x1xf32>
      %43 = arith.mulf %22, %34 : vector<1x768xf32>
      %cst_27 = arith.constant dense<0.000000e+00> : vector<1xf32>
      %44 = vector.multi_reduction <add>, %43, %cst_27 [1] : vector<1x768xf32> to vector<1xf32>
      %45 = vector.shape_cast %44 : vector<1xf32> to vector<1x1xf32>
      %46 = arith.mulf %38, %38 : vector<2x1xf32>
      %47 = vector.broadcast %45 : vector<1x1xf32> to vector<2x1xf32>
      %48 = arith.divf %46, %47 : vector<2x1xf32>
      %49 = arith.subf %42, %48 : vector<2x1xf32>
      %cst_28 = arith.constant dense<0.000000e+00> : vector<1xf32>
      %50 = vector.multi_reduction <add>, %49, %cst_28 [0] : vector<2x1xf32> to vector<1xf32>
      %51 = vector.shape_cast %50 : vector<1xf32> to vector<1x1xf32>
      %52 = arith.addf %30, %51 : vector<1x1xf32>
      %cst_29 = arith.constant 1.000000e+00 : f32
      %53 = vector.broadcast %cst_29 : f32 to vector<1x768xf32>
      %54 = arith.cmpf oeq, %29, %53 : vector<1x768xf32>
      %55 = arith.extui %54 : vector<1x768xi1> to vector<1x768xi32>
      %56 = arith.sitofp %55 : vector<1x768xi32> to vector<1x768xf32>
      %57 = vector.broadcast %56 : vector<1x768xf32> to vector<2x768xf32>
      %58 = arith.mulf %19, %57 : vector<2x768xf32>
      %cst_30 = arith.constant dense<0.000000e+00> : vector<2xf32>
      %59 = vector.multi_reduction <add>, %58, %cst_30 [1] : vector<2x768xf32> to vector<2xf32>
      %60 = vector.shape_cast %59 : vector<2xf32> to vector<2x1xf32>
      %61 = vector.broadcast %56 : vector<1x768xf32> to vector<2x768xf32>
      %62 = arith.mulf %21, %61 : vector<2x768xf32>
      %cst_31 = arith.constant dense<0.000000e+00> : vector<2xf32>
      %63 = vector.multi_reduction <add>, %62, %cst_31 [1] : vector<2x768xf32> to vector<2xf32>
      %64 = vector.shape_cast %63 : vector<2xf32> to vector<2x1xf32>
      %65 = arith.mulf %60, %60 : vector<2x1xf32>
      %66 = vector.broadcast %45 : vector<1x1xf32> to vector<2x1xf32>
      %67 = arith.divf %65, %66 : vector<2x1xf32>
      %68 = arith.subf %64, %67 : vector<2x1xf32>
      %cst_32 = arith.constant dense<0.000000e+00> : vector<1xf32>
      %69 = vector.multi_reduction <add>, %68, %cst_32 [0] : vector<2x1xf32> to vector<1xf32>
      %70 = vector.shape_cast %69 : vector<1xf32> to vector<1x1xf32>
      %71 = arith.addf %52, %70 : vector<1x1xf32>
      %cst_33 = arith.constant 2.000000e+00 : f32
      %72 = vector.broadcast %cst_33 : f32 to vector<1x768xf32>
      %73 = arith.cmpf oeq, %29, %72 : vector<1x768xf32>
      %74 = arith.extui %73 : vector<1x768xi1> to vector<1x768xi32>
      %75 = arith.sitofp %74 : vector<1x768xi32> to vector<1x768xf32>
      %76 = vector.broadcast %75 : vector<1x768xf32> to vector<2x768xf32>
      %77 = arith.mulf %19, %76 : vector<2x768xf32>
      %cst_34 = arith.constant dense<0.000000e+00> : vector<2xf32>
      %78 = vector.multi_reduction <add>, %77, %cst_34 [1] : vector<2x768xf32> to vector<2xf32>
      %79 = vector.shape_cast %78 : vector<2xf32> to vector<2x1xf32>
      %80 = vector.broadcast %75 : vector<1x768xf32> to vector<2x768xf32>
      %81 = arith.mulf %21, %80 : vector<2x768xf32>
      %cst_35 = arith.constant dense<0.000000e+00> : vector<2xf32>
      %82 = vector.multi_reduction <add>, %81, %cst_35 [1] : vector<2x768xf32> to vector<2xf32>
      %83 = vector.shape_cast %82 : vector<2xf32> to vector<2x1xf32>
      %84 = arith.mulf %79, %79 : vector<2x1xf32>
      %85 = vector.broadcast %45 : vector<1x1xf32> to vector<2x1xf32>
      %86 = arith.divf %84, %85 : vector<2x1xf32>
      %87 = arith.subf %83, %86 : vector<2x1xf32>
      %cst_36 = arith.constant dense<0.000000e+00> : vector<1xf32>
      %88 = vector.multi_reduction <add>, %87, %cst_36 [0] : vector<2x1xf32> to vector<1xf32>
      %89 = vector.shape_cast %88 : vector<1xf32> to vector<1x1xf32>
      %90 = arith.addf %71, %89 : vector<1x1xf32>
      %cst_37 = arith.constant 2.000000e+00 : f32
      %91 = vector.broadcast %cst_37 : f32 to vector<1x1xf32>
      %92 = arith.mulf %91, %45 : vector<1x1xf32>
      %93 = arith.divf %90, %92 : vector<1x1xf32>
      %c0_38 = arith.constant 0 : index
      %c0_39 = arith.constant 0 : index
      %94 = vector.load %arg4[%c0_38, %c0_39] : memref<1x1xf32, #tpu.memory_space<vmem>>, vector<1x1xf32>
      tpu.vector_store %arg4[%c0_38, %c0_39], %93 {strides = array<i32>} : memref<1x1xf32, #tpu.memory_space<vmem>>, vector<1x1xf32>,
    } else {
    }
    return
  }
  func.func @transform_0(%arg0: i32) -> (i32, i32) {
    %c0_i32 = arith.constant 0 : i32
    %c0_i32_0 = arith.constant 0 : i32
    return %c0_i32, %arg0 : i32, i32
  }
  func.func @transform_1(%arg0: i32) -> (i32, i32) {
    %c0_i32 = arith.constant 0 : i32
    %c0_i32_0 = arith.constant 0 : i32
    return %c0_i32, %arg0 : i32, i32
  }
  func.func @transform_2(%arg0: i32) -> (i32, i32) {
    %c0_i32 = arith.constant 0 : i32
    %c0_i32_0 = arith.constant 0 : i32
    %c0_i32_1 = arith.constant 0 : i32
    return %c0_i32, %c0_i32_0 : i32, i32
  }
  func.func @transform_3(%arg0: i32) -> (i32, i32) {
    %c0_i32 = arith.constant 0 : i32
    %c0_i32_0 = arith.constant 0 : i32
    %c0_i32_1 = arith.constant 0 : i32
    return %c0_i32, %c0_i32_0 : i32, i32
  }
}

</mosaic_0001>

<llo_original>
// kernel: tpu_custom_call.1
$region0: #{tpu_custom_call.1}
  #allocation0 [shape = 'u32[]', space=smem, size = 0x4, offset = 0x4, fixed_abs, tag = 'smem constant byte address 0x4 - core index']
  #allocation1 [shape = 'u32[144,128]{1,0:T(1,128)}', space=vmem, size = 0x12000, scoped, tag = 'internal scratch']
  #allocation2 [shape = 'f32[2,768]{1,0:T(2,128)}', space=vmem, size = 0x1800, scoped, tag = 'scratch operand']
  #allocation3 [shape = 'f32[2,768]{1,0:T(2,128)}', space=vmem, size = 0x1800, scoped, tag = 'scratch operand']
  #allocation4 [shape = 'f32[1,768]{1,0:T(1,128)}', space=vmem, size = 0xc00, scoped, tag = 'scratch operand']
  #allocation5 [shape = 'f32[2,768]{1,0:T(2,128)}', space=vmem, size = 0x1800, scoped, tag = 'scratch operand']
  #allocation6 [shape = 'f32[1,768]{1,0:T(1,128)}', space=vmem, size = 0xc00, scoped, tag = 'scratch operand']
  #allocation7 [shape = 'f32[2,1]{1,0:T(2,128)}', space=vmem, size = 0x400, scoped, tag = 'scratch operand']
  %s0 = inlined_call_operand.hbm [shape: f32[2,768], index: 0, kind: input, shape index: {}]
  %s1 = inlined_call_operand.hbm [shape: f32[1,768], index: 1, kind: input, shape index: {}]
  %s2 = inlined_call_operand.vmem [shape: f32[1,768], index: 2, kind: input, shape index: {}]
  %s3 = inlined_call_operand.hbm [shape: f32[1,1], index: 3, kind: output, shape index: {}]
  %s4 = sld [smem:[#allocation0]]
  $region38: #{tpu_custom_call.1} parent=0
    _
  %s6 = ssub.s32 1, %s4
  %s7 = scalar_select 0, %s6, %s4
  $region1: #{tpu_custom_call.1} parent=0
    #allocation8 [shape = 'u8[6144]{0}', space=vmem, size = 0x1800, scoped, tag = 'input window, operand 0, single buffered']
    #allocation9 [shape = 's32[1]{0}', space=sflag, size = 0x4, scoped, tag = 'scoped memory for tpu_custom_call.1']
    #allocation10 [shape = 's32[1]{0}', space=sflag, size = 0x4, scoped, tag = 'scoped memory for tpu_custom_call.1']
    #allocation11 [shape = 'u8[3072]{0}', space=vmem, size = 0xc00, scoped, tag = 'input window, operand 1, single buffered']
    #allocation12 [shape = 's32[1]{0}', space=sflag, size = 0x4, scoped, tag = 'scoped memory for tpu_custom_call.1']
    #allocation13 [shape = 'u8[512]{0}', space=vmem, size = 0x400, scoped, tag = 'output window, operand 0, single buffered']
    %8 = vsyncpa [#allocation9], 0
    %9 = vsyncpa [#allocation12], 0
    %10 = vsyncpa [#allocation10], 0
    // Predicated region
    $region2: #{tpu_custom_call.1} parent=1 // pred_check
      _
    $region3: #{tpu_custom_call.1} parent=1 // pred_check_branch
      %12 = sbr.rel (0) target = $region5
    $region4: #{tpu_custom_call.1} parent=1 // pred_region
      %s14 = ssub.s32 192, 192
      %15 = vsyncadd [#allocation9], %s14
      %s17 = sshll.u32 [#allocation8], 4
      %s18 = int_to_ptr.vmem [resolvable:$true] %s17
      %20 = dma.hbm_to_vmem [thread:$0]  %s0, 192, %s18, [#allocation9]
    $region5: #{tpu_custom_call.1} parent=1 // pred_fallthru
      _
    // Predicated region
    $region6: #{tpu_custom_call.1} parent=1 // pred_check
      _
    $region7: #{tpu_custom_call.1} parent=1 // pred_check_branch
      %22 = sbr.rel (0) target = $region9
    $region8: #{tpu_custom_call.1} parent=1 // pred_region
      %s24 = ssub.s32 96, 96
      %25 = vsyncadd [#allocation12], %s24
      %s27 = sshll.u32 [#allocation11], 4
      %s28 = int_to_ptr.vmem [resolvable:$true] %s27
      %30 = dma.hbm_to_vmem [thread:$0]  %s1, 96, %s28, [#allocation12]
    $region9: #{tpu_custom_call.1} parent=1 // pred_fallthru
      _
    // Predicated region
    $region10: #{tpu_custom_call.1} parent=1 // pred_check
      _
    $region11: #{tpu_custom_call.1} parent=1 // pred_check_branch
      %32 = sbr.rel (0) target = $region13
    $region12: #{tpu_custom_call.1} parent=1 // pred_region
      _
    $region13: #{tpu_custom_call.1} parent=1 // pred_fallthru
      _
    // Predicated region
    $region14: #{tpu_custom_call.1} parent=1 // pred_check
      _
    $region15: #{tpu_custom_call.1} parent=1 // pred_check_branch
      %34 = sbr.rel (0) target = $region17
    $region16: #{tpu_custom_call.1} parent=1 // pred_region
      %35 = dma.done [#allocation9], 192
    $region17: #{tpu_custom_call.1} parent=1 // pred_fallthru
      _
    // Predicated region
    $region18: #{tpu_custom_call.1} parent=1 // pred_check
      _
    $region19: #{tpu_custom_call.1} parent=1 // pred_check_branch
      %37 = sbr.rel (0) target = $region21
    $region20: #{tpu_custom_call.1} parent=1 // pred_region
      %38 = dma.done [#allocation12], 96
    $region21: #{tpu_custom_call.1} parent=1 // pred_fallthru
      _
    %p39 = scmp.eq.s32.totalorder 0, 0
    // Predicated region
    $region22: #{tpu_custom_call.1} parent=1 // pred_check
      %p40 = pneg %p39
    $region23: #{tpu_custom_call.1} parent=1 // pred_check_branch
      %42 = sbr.rel (%p40) target = $region25
    $region24: #{tpu_custom_call.1} parent=1 // pred_region
      %43 = vst [vmem:[#allocation2] sm:$0xff] 0.0
      %44 = vst [vmem:[#allocation2 + $0x8] sm:$0xf] 0.0
      %45 = vst [vmem:[#allocation3] sm:$0xff] 0.0
      %46 = vst [vmem:[#allocation3 + $0x8] sm:$0xf] 0.0
      %v47 = vlaneseq
      %vm48 = vcmp.ge.s32.totalorder %v47, 0
      %vm49 = vcmp.lt.s32.totalorder %v47, 768
      %vm50 = vmand %vm48, %vm49
      %51 = vst.msk [vmem:[#allocation4] sm:$0x3f] %vm50, 0.0
      %v52 = vld [vmem:[#allocation11] sm:$0x3f]
      %vm53 = vcmp.ne.f32.partialorder %v52, 0.0
      %v54 = vld [vmem:[#allocation8] sm:$0xff]
      %v55 = vld [vmem:[#allocation8 + $0x8] sm:$0xf]
      %v56 = vsel %vm53, 1, 0
      %v57 = vlaneseq
      %v58 = vshrl.u32 %v57, 7
      %v59 = vsub.s32 0, %v58
      %v60 = vrot.slane %v56, %v59
      %v61 = vlaneseq
      %v62 = vshrl.u32 %v61, 7
      %v63 = vsub.s32 1, %v62
      %v64 = vrot.slane %v56, %v63
      %v65 = vlaneseq
      %v66 = vshrl.u32 %v65, 7
      %v67 = vsub.s32 2, %v66
      %v68 = vrot.slane %v56, %v67
      %v69 = vlaneseq
      %v70 = vshrl.u32 %v69, 7
      %v71 = vsub.s32 3, %v70
      %v72 = vrot.slane %v56, %v71
      %v73 = vlaneseq
      %v74 = vshrl.u32 %v73, 7
      %v75 = vsub.s32 4, %v74
      %v76 = vrot.slane %v56, %v75
      %v77 = vlaneseq
      %v78 = vshrl.u32 %v77, 7
      %v79 = vsub.s32 5, %v78
      %v80 = vrot.slane %v56, %v79
      %vm81 = vcmp.eq.s32.totalorder %v60, 1
      %vm82 = vcmp.eq.s32.totalorder %v64, 1
      %vm83 = vcmp.eq.s32.totalorder %v68, 1
      %vm84 = vcmp.eq.s32.totalorder %v72, 1
      %vm85 = vcmp.eq.s32.totalorder %v76, 1
      %vm86 = vcmp.eq.s32.totalorder %v80, 1
      %v89 = vcombine.high %v54, %v54
      %v91 = vunpack.c.l.s4 1983009808
      %v92 = vunpack.c.0.s8 %v91
      %v93 = vlaneseq
      %v94 = vshrl.u32 %v93, 7
      %v95 = vsub.s32 %v92, %v94
      %v96 = vrot.slane %v54, %v95
      %v98 = vunpack.c.l.s4 1983009808
      %v99 = vunpack.c.0.s8 %v98
      %v100 = vlaneseq
      %v101 = vshrl.u32 %v100, 7
      %v102 = vsub.s32 %v99, %v101
      %v103 = vrot.slane %v89, %v102
      %v104 = vcombine.high %v96, %v96
      %v105 = vcombine.high %v103, %v103
      %v107 = vunpack.c.l.s4 1983009808
      %v108 = vunpack.c.0.s8 %v107
      %v109 = vlaneseq
      %v110 = vshrl.u32 %v109, 7
      %v111 = vsub.s32 %v108, %v110
      %v112 = vrot.slane %v55, %v111
      %v113 = vcombine.high %v112, %v112
      %v120 = vsel %vm81, %v96, 0.0
      %v121 = vsel %vm82, %v104, 0.0
      %v122 = vsel %vm83, %v103, 0.0
      %v123 = vsel %vm84, %v105, 0.0
      %v124 = vsel %vm85, %v112, 0.0
      %v125 = vsel %vm86, %v113, 0.0
      %v127 = vlaneseq
      %v128 = vshrl.u32 %v127, 7
      %v129 = vsub.s32 0, %v128
      %v130 = vrot.slane %v52, %v129
      %v131 = vlaneseq
      %v132 = vshrl.u32 %v131, 7
      %v133 = vsub.s32 1, %v132
      %v134 = vrot.slane %v52, %v133
      %v135 = vlaneseq
      %v136 = vshrl.u32 %v135, 7
      %v137 = vsub.s32 2, %v136
      %v138 = vrot.slane %v52, %v137
      %v139 = vlaneseq
      %v140 = vshrl.u32 %v139, 7
      %v141 = vsub.s32 3, %v140
      %v142 = vrot.slane %v52, %v141
      %v143 = vlaneseq
      %v144 = vshrl.u32 %v143, 7
      %v145 = vsub.s32 4, %v144
      %v146 = vrot.slane %v52, %v145
      %v147 = vlaneseq
      %v148 = vshrl.u32 %v147, 7
      %v149 = vsub.s32 5, %v148
      %v150 = vrot.slane %v52, %v149
      %v157 = vmul.f32 %v120, %v130
      %v158 = vmul.f32 %v121, %v134
      %v159 = vmul.f32 %v122, %v138
      %v160 = vmul.f32 %v123, %v142
      %v161 = vmul.f32 %v124, %v146
      %v162 = vmul.f32 %v125, %v150
      %vm163 = vcmask 1041408
      %v164 = vsel %vm163, %v157, 0.0
      %v165 = vsel %vm163, %v158, 0.0
      %v166 = vadd.f32 %v164, %v165
      %v167 = vsel %vm163, %v159, 0.0
      %v168 = vadd.f32 %v166, %v167
      %v169 = vsel %vm163, %v160, 0.0
      %v170 = vadd.f32 %v168, %v169
      %v171 = vsel %vm163, %v161, 0.0
      %v172 = vadd.f32 %v170, %v171
      %v173 = vsel %vm163, %v162, 0.0
      %v174 = vadd.f32 %v172, %v173
      %175 = vadd.xlane.f32.xlu0 %v174
      %v176 = vpop.xlane.xlu0 %175
      %vm177 = vcmask 1040384
      %v178 = vsel %vm177, %v130, 0.0
      %v179 = vsel %vm177, %v134, 0.0
      %v180 = vadd.f32 %v178, %v179
      %v181 = vsel %vm177, %v138, 0.0
      %v182 = vadd.f32 %v180, %v181
      %v183 = vsel %vm177, %v142, 0.0
      %v184 = vadd.f32 %v182, %v183
      %v185 = vsel %vm177, %v146, 0.0
      %v186 = vadd.f32 %v184, %v185
      %v187 = vsel %vm177, %v150, 0.0
      %v188 = vadd.f32 %v186, %v187
      %189 = vadd.xlane.f32.xlu0 %v188
      %v190 = vpop.xlane.xlu0 %189
      %vm191 = vcmp.gt.f32.partialorder %v190, 0.0
      %v192 = vlaneseq
      %v193 = vshrl.u32 %v192, 7
      %v194 = vsub.s32 0, %v193
      %v195 = vrot.slane %v190, %v194
      %v196 = vrcp.pop %v195
      %v197 = vmul.f32 %v176, %v196
      %v198 = vsel %vm191, 1, 0
      %v199 = vlaneseq
      %v200 = vshrl.u32 %v199, 7
      %v201 = vsub.s32 0, %v200
      %v202 = vrot.slane %v198, %v201
      %vm203 = vcmp.eq.s32.totalorder %v202, 1
      %v204 = vsel %vm203, %v197, 0.0
      %vm205 = vcmask 1024
      %206 = vst.msk [vmem:[#allocation7] sm:$0x3] %vm205, %v204
    $region25: #{tpu_custom_call.1} parent=1 // pred_fallthru
      _
    %v207 = vld [vmem:[#allocation7] sm:$0x3]
    %v208 = vld [vmem:[#allocation2] sm:$0xff]
    %v209 = vld [vmem:[#allocation2 + $0x8] sm:$0xf]
    %v210 = vld [vmem:[#allocation3] sm:$0xff]
    %v211 = vld [vmem:[#allocation3 + $0x8] sm:$0xf]
    %v212 = vld [vmem:[#allocation4] sm:$0x3f]
    %v213 = vld [vmem:[#allocation11] sm:$0x3f]
    %v214 = vld [vmem:[#allocation8] sm:$0xff]
    %v215 = vld [vmem:[#allocation8 + $0x8] sm:$0xf]
    %vm216 = vcmp.ne.f32.partialorder %v213, 0.0
    %v217 = vsel %vm216, 1, 0
    %v218 = vlaneseq
    %v219 = vshrl.u32 %v218, 7
    %v220 = vsub.s32 0, %v219
    %v221 = vrot.slane %v217, %v220
    %v222 = vlaneseq
    %v223 = vshrl.u32 %v222, 7
    %v224 = vsub.s32 1, %v223
    %v225 = vrot.slane %v217, %v224
    %v226 = vlaneseq
    %v227 = vshrl.u32 %v226, 7
    %v228 = vsub.s32 2, %v227
    %v229 = vrot.slane %v217, %v228
    %v230 = vlaneseq
    %v231 = vshrl.u32 %v230, 7
    %v232 = vsub.s32 3, %v231
    %v233 = vrot.slane %v217, %v232
    %v234 = vlaneseq
    %v235 = vshrl.u32 %v234, 7
    %v236 = vsub.s32 4, %v235
    %v237 = vrot.slane %v217, %v236
    %v238 = vlaneseq
    %v239 = vshrl.u32 %v238, 7
    %v240 = vsub.s32 5, %v239
    %v241 = vrot.slane %v217, %v240
    %vm242 = vcmp.eq.s32.totalorder %v221, 1
    %vm243 = vcmp.eq.s32.totalorder %v225, 1
    %vm244 = vcmp.eq.s32.totalorder %v229, 1
    %vm245 = vcmp.eq.s32.totalorder %v233, 1
    %vm246 = vcmp.eq.s32.totalorder %v237, 1
    %vm247 = vcmp.eq.s32.totalorder %v241, 1
    %v250 = vcombine.high %v214, %v214
    %v252 = vunpack.c.l.s4 1983009808
    %v253 = vunpack.c.0.s8 %v252
    %v254 = vlaneseq
    %v255 = vshrl.u32 %v254, 7
    %v256 = vsub.s32 %v253, %v255
    %v257 = vrot.slane %v214, %v256
    %v259 = vunpack.c.l.s4 1983009808
    %v260 = vunpack.c.0.s8 %v259
    %v261 = vlaneseq
    %v262 = vshrl.u32 %v261, 7
    %v263 = vsub.s32 %v260, %v262
    %v264 = vrot.slane %v250, %v263
    %v265 = vcombine.high %v257, %v257
    %v266 = vcombine.high %v264, %v264
    %v268 = vunpack.c.l.s4 1983009808
    %v269 = vunpack.c.0.s8 %v268
    %v270 = vlaneseq
    %v271 = vshrl.u32 %v270, 7
    %v272 = vsub.s32 %v269, %v271
    %v273 = vrot.slane %v215, %v272
    %v274 = vcombine.high %v273, %v273
    %v281 = vsel %vm242, %v257, 0.0
    %v282 = vsel %vm243, %v265, 0.0
    %v283 = vsel %vm244, %v264, 0.0
    %v284 = vsel %vm245, %v266, 0.0
    %v285 = vsel %vm246, %v273, 0.0
    %v286 = vsel %vm247, %v274, 0.0
    %288 = vset.pattern.permute.xlu0 0
    %289 = vperm.xlu0 %288, %v207
    %v290 = vpop.permute.xlu0 %289
    %v292 = vsub.f32 %v281, %v290
    %v293 = vsub.f32 %v282, %v290
    %v294 = vsub.f32 %v283, %v290
    %v295 = vsub.f32 %v284, %v290
    %v296 = vsub.f32 %v285, %v290
    %v297 = vsub.f32 %v286, %v290
    %v299 = vlaneseq
    %v300 = vshrl.u32 %v299, 7
    %v301 = vsub.s32 0, %v300
    %v302 = vrot.slane %v213, %v301
    %v303 = vlaneseq
    %v304 = vshrl.u32 %v303, 7
    %v305 = vsub.s32 1, %v304
    %v306 = vrot.slane %v213, %v305
    %v307 = vlaneseq
    %v308 = vshrl.u32 %v307, 7
    %v309 = vsub.s32 2, %v308
    %v310 = vrot.slane %v213, %v309
    %v311 = vlaneseq
    %v312 = vshrl.u32 %v311, 7
    %v313 = vsub.s32 3, %v312
    %v314 = vrot.slane %v213, %v313
    %v315 = vlaneseq
    %v316 = vshrl.u32 %v315, 7
    %v317 = vsub.s32 4, %v316
    %v318 = vrot.slane %v213, %v317
    %v319 = vlaneseq
    %v320 = vshrl.u32 %v319, 7
    %v321 = vsub.s32 5, %v320
    %v322 = vrot.slane %v213, %v321
    %v329 = vmul.f32 %v302, %v292
    %v330 = vmul.f32 %v306, %v293
    %v331 = vmul.f32 %v310, %v294
    %v332 = vmul.f32 %v314, %v295
    %v333 = vmul.f32 %v318, %v296
    %v334 = vmul.f32 %v322, %v297
    %v341 = vcombine.low %v329, %v330
    %v342 = vcombine.low %v331, %v332
    %v344 = vunpack.c.l.s4 1983009808
    %v345 = vunpack.c.0.s8 %v344
    %v346 = vlaneseq
    %v347 = vshrl.u32 %v346, 7
    %v348 = vsub.s32 %v345, %v347
    %v349 = vrot.slane %v341, %v348
    %v351 = vunpack.c.l.s4 1983009808
    %v352 = vunpack.c.0.s8 %v351
    %v353 = vlaneseq
    %v354 = vshrl.u32 %v353, 7
    %v355 = vsub.s32 %v352, %v354
    %v356 = vrot.slane %v342, %v355
    %v357 = vcombine.low %v349, %v356
    %v358 = vcombine.low %v333, %v334
    %v360 = vunpack.c.l.s4 1983009808
    %v361 = vunpack.c.0.s8 %v360
    %v362 = vlaneseq
    %v363 = vshrl.u32 %v362, 7
    %v364 = vsub.s32 %v361, %v363
    %v365 = vrot.slane %v358, %v364
    %v368 = vadd.f32 %v208, %v357
    %v369 = vadd.f32 %v209, %v365
    %v370 = vmul.f32 %v329, %v329
    %v371 = vmul.f32 %v330, %v330
    %v372 = vmul.f32 %v331, %v331
    %v373 = vmul.f32 %v332, %v332
    %v374 = vmul.f32 %v333, %v333
    %v375 = vmul.f32 %v334, %v334
    %v382 = vcombine.low %v370, %v371
    %v383 = vcombine.low %v372, %v373
    %v385 = vunpack.c.l.s4 1983009808
    %v386 = vunpack.c.0.s8 %v385
    %v387 = vlaneseq
    %v388 = vshrl.u32 %v387, 7
    %v389 = vsub.s32 %v386, %v388
    %v390 = vrot.slane %v382, %v389
    %v392 = vunpack.c.l.s4 1983009808
    %v393 = vunpack.c.0.s8 %v392
    %v394 = vlaneseq
    %v395 = vshrl.u32 %v394, 7
    %v396 = vsub.s32 %v393, %v395
    %v397 = vrot.slane %v383, %v396
    %v398 = vcombine.low %v390, %v397
    %v399 = vcombine.low %v374, %v375
    %v401 = vunpack.c.l.s4 1983009808
    %v402 = vunpack.c.0.s8 %v401
    %v403 = vlaneseq
    %v404 = vshrl.u32 %v403, 7
    %v405 = vsub.s32 %v402, %v404
    %v406 = vrot.slane %v399, %v405
    %v409 = vadd.f32 %v210, %v398
    %v410 = vadd.f32 %v211, %v406
    %v411 = vadd.f32 %v212, %v213
    %412 = vst [vmem:[#allocation2] sm:$0xff] %v368
    %413 = vst [vmem:[#allocation2 + $0x8] sm:$0xf] %v369
    %414 = vst [vmem:[#allocation3] sm:$0xff] %v409
    %415 = vst [vmem:[#allocation3 + $0x8] sm:$0xf] %v410
    %v416 = vlaneseq
    %vm417 = vcmp.ge.s32.totalorder %v416, 0
    %vm418 = vcmp.lt.s32.totalorder %v416, 768
    %vm419 = vmand %vm417, %vm418
    %420 = vst.msk [vmem:[#allocation4] sm:$0x3f] %vm419, %v411
    // Predicated region
    $region26: #{tpu_custom_call.1} parent=1 // pred_check
      %p421 = pneg %p39
    $region27: #{tpu_custom_call.1} parent=1 // pred_check_branch
      %423 = sbr.rel (%p421) target = $region29
    $region28: #{tpu_custom_call.1} parent=1 // pred_region
      %v424 = vld [vmem:[%s2] sm:$0x3f]
      %vm425 = vcmp.eq.f32.partialorder %v424, 0.0
      %v426 = vsel %vm425, 1, 0
      %v427 = vcvt.s32.f32 %v426
      %v429 = vlaneseq
      %v430 = vshrl.u32 %v429, 7
      %v431 = vsub.s32 0, %v430
      %v432 = vrot.slane %v427, %v431
      %v433 = vlaneseq
      %v434 = vshrl.u32 %v433, 7
      %v435 = vsub.s32 1, %v434
      %v436 = vrot.slane %v427, %v435
      %v437 = vlaneseq
      %v438 = vshrl.u32 %v437, 7
      %v439 = vsub.s32 2, %v438
      %v440 = vrot.slane %v427, %v439
      %v441 = vlaneseq
      %v442 = vshrl.u32 %v441, 7
      %v443 = vsub.s32 3, %v442
      %v444 = vrot.slane %v427, %v443
      %v445 = vlaneseq
      %v446 = vshrl.u32 %v445, 7
      %v447 = vsub.s32 4, %v446
      %v448 = vrot.slane %v427, %v447
      %v449 = vlaneseq
      %v450 = vshrl.u32 %v449, 7
      %v451 = vsub.s32 5, %v450
      %v452 = vrot.slane %v427, %v451
      %v453 = vcombine.low %v432, %v436
      %v454 = vcombine.low %v440, %v444
      %v456 = vunpack.c.l.s4 1983009808
      %v457 = vunpack.c.0.s8 %v456
      %v458 = vlaneseq
      %v459 = vshrl.u32 %v458, 7
      %v460 = vsub.s32 %v457, %v459
      %v461 = vrot.slane %v453, %v460
      %v463 = vunpack.c.l.s4 1983009808
      %v464 = vunpack.c.0.s8 %v463
      %v465 = vlaneseq
      %v466 = vshrl.u32 %v465, 7
      %v467 = vsub.s32 %v464, %v466
      %v468 = vrot.slane %v454, %v467
      %v469 = vcombine.low %v461, %v468
      %v470 = vcombine.low %v448, %v452
      %v472 = vunpack.c.l.s4 1983009808
      %v473 = vunpack.c.0.s8 %v472
      %v474 = vlaneseq
      %v475 = vshrl.u32 %v474, 7
      %v476 = vsub.s32 %v473, %v475
      %v477 = vrot.slane %v470, %v476
      %v480 = vmul.f32 %v368, %v469
      %v481 = vmul.f32 %v369, %v477
      %v484 = vcombine.high %v480, %v480
      %v486 = vunpack.c.l.s4 1983009808
      %v487 = vunpack.c.0.s8 %v486
      %v488 = vlaneseq
      %v489 = vshrl.u32 %v488, 7
      %v490 = vsub.s32 %v487, %v489
      %v491 = vrot.slane %v480, %v490
      %v493 = vunpack.c.l.s4 1983009808
      %v494 = vunpack.c.0.s8 %v493
      %v495 = vlaneseq
      %v496 = vshrl.u32 %v495, 7
      %v497 = vsub.s32 %v494, %v496
      %v498 = vrot.slane %v484, %v497
      %v499 = vcombine.high %v491, %v491
      %v500 = vcombine.high %v498, %v498
      %v502 = vunpack.c.l.s4 1983009808
      %v503 = vunpack.c.0.s8 %v502
      %v504 = vlaneseq
      %v505 = vshrl.u32 %v504, 7
      %v506 = vsub.s32 %v503, %v505
      %v507 = vrot.slane %v481, %v506
      %v508 = vcombine.high %v507, %v507
      %vm515 = vcmask 1041408
      %v516 = vsel %vm515, %v491, 0.0
      %v517 = vsel %vm515, %v499, 0.0
      %v518 = vadd.f32 %v516, %v517
      %v519 = vsel %vm515, %v498, 0.0
      %v520 = vadd.f32 %v518, %v519
      %v521 = vsel %vm515, %v500, 0.0
      %v522 = vadd.f32 %v520, %v521
      %v523 = vsel %vm515, %v507, 0.0
      %v524 = vadd.f32 %v522, %v523
      %v525 = vsel %vm515, %v508, 0.0
      %v526 = vadd.f32 %v524, %v525
      %527 = vadd.xlane.f32.xlu0 %v526
      %v528 = vpop.xlane.xlu0 %527
      %v529 = vmul.f32 %v409, %v469
      %v530 = vmul.f32 %v410, %v477
      %v533 = vcombine.high %v529, %v529
      %v535 = vunpack.c.l.s4 1983009808
      %v536 = vunpack.c.0.s8 %v535
      %v537 = vlaneseq
      %v538 = vshrl.u32 %v537, 7
      %v539 = vsub.s32 %v536, %v538
      %v540 = vrot.slane %v529, %v539
      %v542 = vunpack.c.l.s4 1983009808
      %v543 = vunpack.c.0.s8 %v542
      %v544 = vlaneseq
      %v545 = vshrl.u32 %v544, 7
      %v546 = vsub.s32 %v543, %v545
      %v547 = vrot.slane %v533, %v546
      %v548 = vcombine.high %v540, %v540
      %v549 = vcombine.high %v547, %v547
      %v551 = vunpack.c.l.s4 1983009808
      %v552 = vunpack.c.0.s8 %v551
      %v553 = vlaneseq
      %v554 = vshrl.u32 %v553, 7
      %v555 = vsub.s32 %v552, %v554
      %v556 = vrot.slane %v530, %v555
      %v557 = vcombine.high %v556, %v556
      %v564 = vsel %vm515, %v540, 0.0
      %v565 = vsel %vm515, %v548, 0.0
      %v566 = vadd.f32 %v564, %v565
      %v567 = vsel %vm515, %v547, 0.0
      %v568 = vadd.f32 %v566, %v567
      %v569 = vsel %vm515, %v549, 0.0
      %v570 = vadd.f32 %v568, %v569
      %v571 = vsel %vm515, %v556, 0.0
      %v572 = vadd.f32 %v570, %v571
      %v573 = vsel %vm515, %v557, 0.0
      %v574 = vadd.f32 %v572, %v573
      %575 = vadd.xlane.f32.xlu0 %v574
      %v576 = vpop.xlane.xlu0 %575
      %v577 = vmul.f32 %v411, %v427
      %v579 = vlaneseq
      %v580 = vshrl.u32 %v579, 7
      %v581 = vsub.s32 0, %v580
      %v582 = vrot.slane %v577, %v581
      %v583 = vlaneseq
      %v584 = vshrl.u32 %v583, 7
      %v585 = vsub.s32 1, %v584
      %v586 = vrot.slane %v577, %v585
      %v587 = vlaneseq
      %v588 = vshrl.u32 %v587, 7
      %v589 = vsub.s32 2, %v588
      %v590 = vrot.slane %v577, %v589
      %v591 = vlaneseq
      %v592 = vshrl.u32 %v591, 7
      %v593 = vsub.s32 3, %v592
      %v594 = vrot.slane %v577, %v593
      %v595 = vlaneseq
      %v596 = vshrl.u32 %v595, 7
      %v597 = vsub.s32 4, %v596
      %v598 = vrot.slane %v577, %v597
      %v599 = vlaneseq
      %v600 = vshrl.u32 %v599, 7
      %v601 = vsub.s32 5, %v600
      %v602 = vrot.slane %v577, %v601
      %vm609 = vcmask 1040384
      %v610 = vsel %vm609, %v582, 0.0
      %v611 = vsel %vm609, %v586, 0.0
      %v612 = vadd.f32 %v610, %v611
      %v613 = vsel %vm609, %v590, 0.0
      %v614 = vadd.f32 %v612, %v613
      %v615 = vsel %vm609, %v594, 0.0
      %v616 = vadd.f32 %v614, %v615
      %v617 = vsel %vm609, %v598, 0.0
      %v618 = vadd.f32 %v616, %v617
      %v619 = vsel %vm609, %v602, 0.0
      %v620 = vadd.f32 %v618, %v619
      %621 = vadd.xlane.f32.xlu0 %v620
      %v622 = vpop.xlane.xlu0 %621
      %v623 = vmul.f32 %v528, %v528
      %v624 = vlaneseq
      %v625 = vshrl.u32 %v624, 7
      %v626 = vsub.s32 0, %v625
      %v627 = vrot.slane %v622, %v626
      %v628 = vrcp.pop %v627
      %v629 = vmul.f32 %v623, %v628
      %v630 = vsub.f32 %v576, %v629
      %v631 = vsel %vm515, %v630, 0.0
      %v632 = vrot.slane %v631, 4
      %v633 = vadd.f32 %v631, %v632
      %v634 = vrot.slane %v633, 2
      %v635 = vadd.f32 %v633, %v634
      %v636 = vrot.slane %v635, 1
      %v637 = vadd.f32 %v635, %v636
      %v638 = vadd.f32 %v637, 0.0
      %vm639 = vcmp.eq.f32.partialorder %v424, 1.0
      %v640 = vsel %vm639, 1, 0
      %v641 = vcvt.s32.f32 %v640
      %v643 = vlaneseq
      %v644 = vshrl.u32 %v643, 7
      %v645 = vsub.s32 0, %v644
      %v646 = vrot.slane %v641, %v645
      %v647 = vlaneseq
      %v648 = vshrl.u32 %v647, 7
      %v649 = vsub.s32 1, %v648
      %v650 = vrot.slane %v641, %v649
      %v651 = vlaneseq
      %v652 = vshrl.u32 %v651, 7
      %v653 = vsub.s32 2, %v652
      %v654 = vrot.slane %v641, %v653
      %v655 = vlaneseq
      %v656 = vshrl.u32 %v655, 7
      %v657 = vsub.s32 3, %v656
      %v658 = vrot.slane %v641, %v657
      %v659 = vlaneseq
      %v660 = vshrl.u32 %v659, 7
      %v661 = vsub.s32 4, %v660
      %v662 = vrot.slane %v641, %v661
      %v663 = vlaneseq
      %v664 = vshrl.u32 %v663, 7
      %v665 = vsub.s32 5, %v664
      %v666 = vrot.slane %v641, %v665
      %v667 = vcombine.low %v646, %v650
      %v668 = vcombine.low %v654, %v658
      %v670 = vunpack.c.l.s4 1983009808
      %v671 = vunpack.c.0.s8 %v670
      %v672 = vlaneseq
      %v673 = vshrl.u32 %v672, 7
      %v674 = vsub.s32 %v671, %v673
      %v675 = vrot.slane %v667, %v674
      %v677 = vunpack.c.l.s4 1983009808
      %v678 = vunpack.c.0.s8 %v677
      %v679 = vlaneseq
      %v680 = vshrl.u32 %v679, 7
      %v681 = vsub.s32 %v678, %v680
      %v682 = vrot.slane %v668, %v681
      %v683 = vcombine.low %v675, %v682
      %v684 = vcombine.low %v662, %v666
      %v686 = vunpack.c.l.s4 1983009808
      %v687 = vunpack.c.0.s8 %v686
      %v688 = vlaneseq
      %v689 = vshrl.u32 %v688, 7
      %v690 = vsub.s32 %v687, %v689
      %v691 = vrot.slane %v684, %v690
      %v694 = vmul.f32 %v368, %v683
      %v695 = vmul.f32 %v369, %v691
      %v698 = vcombine.high %v694, %v694
      %v700 = vunpack.c.l.s4 1983009808
      %v701 = vunpack.c.0.s8 %v700
      %v702 = vlaneseq
      %v703 = vshrl.u32 %v702, 7
      %v704 = vsub.s32 %v701, %v703
      %v705 = vrot.slane %v694, %v704
      %v707 = vunpack.c.l.s4 1983009808
      %v708 = vunpack.c.0.s8 %v707
      %v709 = vlaneseq
      %v710 = vshrl.u32 %v709, 7
      %v711 = vsub.s32 %v708, %v710
      %v712 = vrot.slane %v698, %v711
      %v713 = vcombine.high %v705, %v705
      %v714 = vcombine.high %v712, %v712
      %v716 = vunpack.c.l.s4 1983009808
      %v717 = vunpack.c.0.s8 %v716
      %v718 = vlaneseq
      %v719 = vshrl.u32 %v718, 7
      %v720 = vsub.s32 %v717, %v719
      %v721 = vrot.slane %v695, %v720
      %v722 = vcombine.high %v721, %v721
      %v729 = vsel %vm515, %v705, 0.0
      %v730 = vsel %vm515, %v713, 0.0
      %v731 = vadd.f32 %v729, %v730
      %v732 = vsel %vm515, %v712, 0.0
      %v733 = vadd.f32 %v731, %v732
      %v734 = vsel %vm515, %v714, 0.0
      %v735 = vadd.f32 %v733, %v734
      %v736 = vsel %vm515, %v721, 0.0
      %v737 = vadd.f32 %v735, %v736
      %v738 = vsel %vm515, %v722, 0.0
      %v739 = vadd.f32 %v737, %v738
      %740 = vadd.xlane.f32.xlu0 %v739
      %v741 = vpop.xlane.xlu0 %740
      %v742 = vmul.f32 %v409, %v683
      %v743 = vmul.f32 %v410, %v691
      %v746 = vcombine.high %v742, %v742
      %v748 = vunpack.c.l.s4 1983009808
      %v749 = vunpack.c.0.s8 %v748
      %v750 = vlaneseq
      %v751 = vshrl.u32 %v750, 7
      %v752 = vsub.s32 %v749, %v751
      %v753 = vrot.slane %v742, %v752
      %v755 = vunpack.c.l.s4 1983009808
      %v756 = vunpack.c.0.s8 %v755
      %v757 = vlaneseq
      %v758 = vshrl.u32 %v757, 7
      %v759 = vsub.s32 %v756, %v758
      %v760 = vrot.slane %v746, %v759
      %v761 = vcombine.high %v753, %v753
      %v762 = vcombine.high %v760, %v760
      %v764 = vunpack.c.l.s4 1983009808
      %v765 = vunpack.c.0.s8 %v764
      %v766 = vlaneseq
      %v767 = vshrl.u32 %v766, 7
      %v768 = vsub.s32 %v765, %v767
      %v769 = vrot.slane %v743, %v768
      %v770 = vcombine.high %v769, %v769
      %v777 = vsel %vm515, %v753, 0.0
      %v778 = vsel %vm515, %v761, 0.0
      %v779 = vadd.f32 %v777, %v778
      %v780 = vsel %vm515, %v760, 0.0
      %v781 = vadd.f32 %v779, %v780
      %v782 = vsel %vm515, %v762, 0.0
      %v783 = vadd.f32 %v781, %v782
      %v784 = vsel %vm515, %v769, 0.0
      %v785 = vadd.f32 %v783, %v784
      %v786 = vsel %vm515, %v770, 0.0
      %v787 = vadd.f32 %v785, %v786
      %788 = vadd.xlane.f32.xlu0 %v787
      %v789 = vpop.xlane.xlu0 %788
      %v790 = vmul.f32 %v741, %v741
      %v791 = vmul.f32 %v790, %v628
      %v792 = vsub.f32 %v789, %v791
      %v793 = vsel %vm515, %v792, 0.0
      %v794 = vrot.slane %v793, 4
      %v795 = vadd.f32 %v793, %v794
      %v796 = vrot.slane %v795, 2
      %v797 = vadd.f32 %v795, %v796
      %v798 = vrot.slane %v797, 1
      %v799 = vadd.f32 %v797, %v798
      %v800 = vadd.f32 %v638, %v799
      %vm801 = vcmp.eq.f32.partialorder %v424, 2.0
      %v802 = vsel %vm801, 1, 0
      %v803 = vcvt.s32.f32 %v802
      %v805 = vlaneseq
      %v806 = vshrl.u32 %v805, 7
      %v807 = vsub.s32 0, %v806
      %v808 = vrot.slane %v803, %v807
      %v809 = vlaneseq
      %v810 = vshrl.u32 %v809, 7
      %v811 = vsub.s32 1, %v810
      %v812 = vrot.slane %v803, %v811
      %v813 = vlaneseq
      %v814 = vshrl.u32 %v813, 7
      %v815 = vsub.s32 2, %v814
      %v816 = vrot.slane %v803, %v815
      %v817 = vlaneseq
      %v818 = vshrl.u32 %v817, 7
      %v819 = vsub.s32 3, %v818
      %v820 = vrot.slane %v803, %v819
      %v821 = vlaneseq
      %v822 = vshrl.u32 %v821, 7
      %v823 = vsub.s32 4, %v822
      %v824 = vrot.slane %v803, %v823
      %v825 = vlaneseq
      %v826 = vshrl.u32 %v825, 7
      %v827 = vsub.s32 5, %v826
      %v828 = vrot.slane %v803, %v827
      %v829 = vcombine.low %v808, %v812
      %v830 = vcombine.low %v816, %v820
      %v832 = vunpack.c.l.s4 1983009808
      %v833 = vunpack.c.0.s8 %v832
      %v834 = vlaneseq
      %v835 = vshrl.u32 %v834, 7
      %v836 = vsub.s32 %v833, %v835
      %v837 = vrot.slane %v829, %v836
      %v839 = vunpack.c.l.s4 1983009808
      %v840 = vunpack.c.0.s8 %v839
      %v841 = vlaneseq
      %v842 = vshrl.u32 %v841, 7
      %v843 = vsub.s32 %v840, %v842
      %v844 = vrot.slane %v830, %v843
      %v845 = vcombine.low %v837, %v844
      %v846 = vcombine.low %v824, %v828
      %v848 = vunpack.c.l.s4 1983009808
      %v849 = vunpack.c.0.s8 %v848
      %v850 = vlaneseq
      %v851 = vshrl.u32 %v850, 7
      %v852 = vsub.s32 %v849, %v851
      %v853 = vrot.slane %v846, %v852
      %v856 = vmul.f32 %v368, %v845
      %v857 = vmul.f32 %v369, %v853
      %v860 = vcombine.high %v856, %v856
      %v862 = vunpack.c.l.s4 1983009808
      %v863 = vunpack.c.0.s8 %v862
      %v864 = vlaneseq
      %v865 = vshrl.u32 %v864, 7
      %v866 = vsub.s32 %v863, %v865
      %v867 = vrot.slane %v856, %v866
      %v869 = vunpack.c.l.s4 1983009808
      %v870 = vunpack.c.0.s8 %v869
      %v871 = vlaneseq
      %v872 = vshrl.u32 %v871, 7
      %v873 = vsub.s32 %v870, %v872
      %v874 = vrot.slane %v860, %v873
      %v875 = vcombine.high %v867, %v867
      %v876 = vcombine.high %v874, %v874
      %v878 = vunpack.c.l.s4 1983009808
      %v879 = vunpack.c.0.s8 %v878
      %v880 = vlaneseq
      %v881 = vshrl.u32 %v880, 7
      %v882 = vsub.s32 %v879, %v881
      %v883 = vrot.slane %v857, %v882
      %v884 = vcombine.high %v883, %v883
      %v891 = vsel %vm515, %v867, 0.0
      %v892 = vsel %vm515, %v875, 0.0
      %v893 = vadd.f32 %v891, %v892
      %v894 = vsel %vm515, %v874, 0.0
      %v895 = vadd.f32 %v893, %v894
      %v896 = vsel %vm515, %v876, 0.0
      %v897 = vadd.f32 %v895, %v896
      %v898 = vsel %vm515, %v883, 0.0
      %v899 = vadd.f32 %v897, %v898
      %v900 = vsel %vm515, %v884, 0.0
      %v901 = vadd.f32 %v899, %v900
      %902 = vadd.xlane.f32.xlu0 %v901
      %v903 = vpop.xlane.xlu0 %902
      %v904 = vmul.f32 %v409, %v845
      %v905 = vmul.f32 %v410, %v853
      %v908 = vcombine.high %v904, %v904
      %v910 = vunpack.c.l.s4 1983009808
      %v911 = vunpack.c.0.s8 %v910
      %v912 = vlaneseq
      %v913 = vshrl.u32 %v912, 7
      %v914 = vsub.s32 %v911, %v913
      %v915 = vrot.slane %v904, %v914
      %v917 = vunpack.c.l.s4 1983009808
      %v918 = vunpack.c.0.s8 %v917
      %v919 = vlaneseq
      %v920 = vshrl.u32 %v919, 7
      %v921 = vsub.s32 %v918, %v920
      %v922 = vrot.slane %v908, %v921
      %v923 = vcombine.high %v915, %v915
      %v924 = vcombine.high %v922, %v922
      %v926 = vunpack.c.l.s4 1983009808
      %v927 = vunpack.c.0.s8 %v926
      %v928 = vlaneseq
      %v929 = vshrl.u32 %v928, 7
      %v930 = vsub.s32 %v927, %v929
      %v931 = vrot.slane %v905, %v930
      %v932 = vcombine.high %v931, %v931
      %v939 = vsel %vm515, %v915, 0.0
      %v940 = vsel %vm515, %v923, 0.0
      %v941 = vadd.f32 %v939, %v940
      %v942 = vsel %vm515, %v922, 0.0
      %v943 = vadd.f32 %v941, %v942
      %v944 = vsel %vm515, %v924, 0.0
      %v945 = vadd.f32 %v943, %v944
      %v946 = vsel %vm515, %v931, 0.0
      %v947 = vadd.f32 %v945, %v946
      %v948 = vsel %vm515, %v932, 0.0
      %v949 = vadd.f32 %v947, %v948
      %950 = vadd.xlane.f32.xlu0 %v949
      %v951 = vpop.xlane.xlu0 %950
      %v952 = vmul.f32 %v903, %v903
      %v953 = vmul.f32 %v952, %v628
      %v954 = vsub.f32 %v951, %v953
      %v955 = vsel %vm515, %v954, 0.0
      %v956 = vrot.slane %v955, 4
      %v957 = vadd.f32 %v955, %v956
      %v958 = vrot.slane %v957, 2
      %v959 = vadd.f32 %v957, %v958
      %v960 = vrot.slane %v959, 1
      %v961 = vadd.f32 %v959, %v960
      %v962 = vadd.f32 %v800, %v961
      %v963 = vmul.f32 %v622, 2.0
      %v964 = vrcp.pop %v963
      %v965 = vmul.f32 %v962, %v964
      %vm966 = vcmask 0
      %967 = vst.msk [vmem:[#allocation13] sm:$0x1] %vm966, %v965
    $region29: #{tpu_custom_call.1} parent=1 // pred_fallthru
      _
    // Predicated region
    $region30: #{tpu_custom_call.1} parent=1 // pred_check
      _
    $region31: #{tpu_custom_call.1} parent=1 // pred_check_branch
      %969 = sbr.rel (0) target = $region33
    $region32: #{tpu_custom_call.1} parent=1 // pred_region
      %s971 = ssub.s32 16, 16
      %972 = vsyncadd [#allocation10], %s971
      %s974 = sshll.u32 [#allocation13], 4
      %s975 = int_to_ptr.vmem [resolvable:$true] %s974
      %977 = dma.vmem_to_hbm [thread:$0]  %s975, 16, %s3, [#allocation10]
    $region33: #{tpu_custom_call.1} parent=1 // pred_fallthru
      _
    // Predicated region
    $region34: #{tpu_custom_call.1} parent=1 // pred_check
      _
    $region35: #{tpu_custom_call.1} parent=1 // pred_check_branch
      %979 = sbr.rel (0) target = $region37
    $region36: #{tpu_custom_call.1} parent=1 // pred_region
      %980 = dma.done [#allocation10], 16
    $region37: #{tpu_custom_call.1} parent=1 // pred_fallthru
      _
    %981 = vsyncpa [#allocation9], 1
    %982 = vsyncpa [#allocation12], 1
    %983 = vsyncpa [#allocation10], 1

</llo_original>
